<compile_context>
chip_gen: v7x
topology: tpu7x:2x2x1
jax: 0.10.0
libtpu: 0.0.40
codegen_flags: <defaults>
</compile_context>

<pallas_src>
import math

import jax
import jax.numpy as jnp
from jax.experimental import pallas as pl
from jax.experimental.pallas import tpu as pltpu

LANE = 128  # TPU lane width; pad the class dim to this for lane-dense stores.


def _lr_kernel(x_ref, wt_ref, b_ref, o_ref):
    """o = x @ w_packed + bias_packed, all operands fully resident in VMEM.

    x_ref:  (B, F)      float32
    wt_ref: (F, Cpad)   float32  -- weight pre-transposed + zero-padded to 128 lanes
    b_ref:  (1, Cpad)   float32
    o_ref:  (B, Cpad)   float32
    """
    logits = jax.lax.dot_general(
        x_ref[...],
        wt_ref[...],
        dimension_numbers=(((1,), (0,)), ((), ())),  # contract F (K) dims
        preferred_element_type=jnp.float32,
    )
    o_ref[...] = logits + b_ref[...]  # f32 bias add (accumulator dtype)


def pack_params(weight, bias):
    """One-time parameter packing (do NOT call per forward).

    weight: (C, F) float32  (PyTorch nn.Linear convention)
    bias:   (C,)   float32
    returns w_packed (F, Cpad) float32, b_packed (1, Cpad) float32
    """
    C, F = weight.shape
    c_pad = max(LANE, ((C + LANE - 1) // LANE) * LANE)
    w_packed = jnp.zeros((F, c_pad), jnp.float32).at[:, :C].set(weight.T)
    b_packed = jnp.zeros((1, c_pad), jnp.float32).at[0, :C].set(bias)
    return w_packed, b_packed


def logistic_regression_forward(x, w_packed, b_packed, num_classes):
    """logits = x @ weight.T + bias  (exact nn.Linear forward semantics).

    x:        (B, F)      float32
    w_packed: (F, Cpad)   float32  from pack_params
    b_packed: (1, Cpad)   float32  from pack_params
    returns   (B, num_classes) float32
    """
    B, F = x.shape
    Fw, Cpad = w_packed.shape
    assert F == Fw, "weight feature dim must match input feature dim"

    out_padded = pl.pallas_call(
        _lr_kernel,
        out_shape=jax.ShapeDtypeStruct((B, Cpad), jnp.float32),
        in_specs=[
            pl.BlockSpec(memory_space=pltpu.MemorySpace.VMEM),  # x
            pl.BlockSpec(memory_space=pltpu.MemorySpace.VMEM),  # packed weight
            pl.BlockSpec(memory_space=pltpu.MemorySpace.VMEM),  # packed bias
        ],
        out_specs=pl.BlockSpec(memory_space=pltpu.MemorySpace.VMEM),
    )(x, w_packed, b_packed)

    # Trace-time slice back to the real class count (padding columns are exact 0s).
    return out_padded[:, :num_classes]


if __name__ == "__main__":
    # Config: channels=3, height=16, width=16 -> 768 features; classes=10; batch=2.
    batch, channels, height, width, classes = 2, 3, 16, 16, 10
    features = channels * height * width

    key = jax.random.PRNGKey(0)
    kx, kw, kb = jax.random.split(key, 3)

    # Deterministic param init mimicking PyTorch nn.Linear: U(-1/sqrt(F), 1/sqrt(F)).
    bound = 1.0 / math.sqrt(features)
    weight = jax.random.uniform(kw, (classes, features), jnp.float32, -bound, bound)
    bias = jax.random.uniform(kb, (classes,), jnp.float32, -bound, bound)

    # One-time packing (transpose + lane padding), kept out of the per-call path.
    w_packed, b_packed = pack_params(weight, bias)

    # Input: NCHW image batch, flattened row-major exactly like torch .view(B, -1).
    x_img = jax.random.normal(kx, (batch, channels, height, width), jnp.float32)
    x = x_img.reshape(batch, features)

    logits = logistic_regression_forward(x, w_packed, b_packed, classes)
    logits = jax.block_until_ready(logits)

    # Correctness check against plain JAX reference.
    ref = x @ weight.T + bias
    assert logits.shape == (batch, classes)
    assert jnp.allclose(logits, ref, atol=1e-5, rtol=1e-5)

    print("KERNEL_OK")
</pallas_src>

<mosaic_0001>
module attributes {stable_mosaic.version = 11 : i64} {
  func.func @_lr_kernel(%arg0: memref<2x768xf32, #tpu.memory_space<vmem>>, %arg1: memref<768x128xf32, #tpu.memory_space<vmem>>, %arg2: memref<1x128xf32, #tpu.memory_space<vmem>>, %arg3: memref<2x128xf32, #tpu.memory_space<vmem>>) attributes {dimension_semantics = [], scalar_prefetch = 0 : i64, scratch_operands = 0 : i64, tpu.core_type = #tpu.core_type<tc>} {
    %c0 = arith.constant 0 : index
    %c0_0 = arith.constant 0 : index
    %0 = vector.load %arg0[%c0, %c0_0] : memref<2x768xf32, #tpu.memory_space<vmem>>, vector<2x768xf32>
    %c0_1 = arith.constant 0 : index
    %c0_2 = arith.constant 0 : index
    %1 = vector.load %arg1[%c0_1, %c0_2] : memref<768x128xf32, #tpu.memory_space<vmem>>, vector<768x128xf32>
    %cst = arith.constant dense<0.000000e+00> : vector<2x128xf32>
    %2 = tpu.matmul %0, %1, %cst {dimension_numbers = #tpu.dot_dimension_numbers<[1], [0], [0], [1], [0, 0, 1, 1], [], []>} : vector<2x768xf32>, vector<768x128xf32>, vector<2x128xf32> -> vector<2x128xf32>
    %c0_3 = arith.constant 0 : index
    %c0_4 = arith.constant 0 : index
    %3 = vector.load %arg2[%c0_3, %c0_4] : memref<1x128xf32, #tpu.memory_space<vmem>>, vector<1x128xf32>
    %4 = vector.broadcast %3 : vector<1x128xf32> to vector<2x128xf32>
    %5 = arith.addf %2, %4 : vector<2x128xf32>
    %c0_5 = arith.constant 0 : index
    %c0_6 = arith.constant 0 : index
    %6 = vector.load %arg3[%c0_5, %c0_6] : memref<2x128xf32, #tpu.memory_space<vmem>>, vector<2x128xf32>
    tpu.vector_store %arg3[%c0_5, %c0_6], %5 {strides = array<i32>} : memref<2x128xf32, #tpu.memory_space<vmem>>, vector<2x128xf32>,
    return
  }
}

</mosaic_0001>

<llo_original>
// kernel: tpu_custom_call.1
$region0: #{tpu_custom_call.1}
  #allocation0 [shape = 'u32[]', space=smem, size = 0x4, offset = 0x4, fixed_abs, tag = 'smem constant byte address 0x4 - core index']
  #allocation1 [shape = 'u32[144,128]{1,0:T(1,128)}', space=vmem, size = 0x12000, scoped, tag = 'internal scratch']
  %s0 = inlined_call_operand.hbm [shape: f32[2,768], index: 0, kind: input, shape index: {}]
  %s1 = inlined_call_operand.hbm [shape: f32[768,128], index: 1, kind: input, shape index: {}]
  %s2 = inlined_call_operand.vmem [shape: f32[1,128], index: 2, kind: input, shape index: {}]
  %s3 = inlined_call_operand.hbm [shape: f32[2,128], index: 3, kind: output, shape index: {}]
  %s4 = sld [smem:[#allocation0]]
  $region30: #{tpu_custom_call.1} parent=0
    _
  %s6 = ssub.s32 1, %s4
  %s7 = scalar_select 0, %s6, %s4
  $region1: #{tpu_custom_call.1} parent=0
    #allocation2 [shape = 'u8[6144]{0}', space=vmem, size = 0x1800, scoped, tag = 'input window, operand 0, single buffered']
    #allocation3 [shape = 's32[1]{0}', space=sflag, size = 0x4, scoped, tag = 'scoped memory for tpu_custom_call.1']
    #allocation4 [shape = 's32[1]{0}', space=sflag, size = 0x4, scoped, tag = 'scoped memory for tpu_custom_call.1']
    #allocation5 [shape = 'u8[393216]{0}', space=vmem, size = 0x60000, scoped, tag = 'input window, operand 1, single buffered']
    #allocation6 [shape = 's32[1]{0}', space=sflag, size = 0x4, scoped, tag = 'scoped memory for tpu_custom_call.1']
    #allocation7 [shape = 'u8[1024]{0}', space=vmem, size = 0x400, scoped, tag = 'output window, operand 0, single buffered']
    %8 = vsyncpa [#allocation3], 0
    %9 = vsyncpa [#allocation6], 0
    %10 = vsyncpa [#allocation4], 0
    // Predicated region
    $region2: #{tpu_custom_call.1} parent=1 // pred_check
      _
    $region3: #{tpu_custom_call.1} parent=1 // pred_check_branch
      %12 = sbr.rel (0) target = $region5
    $region4: #{tpu_custom_call.1} parent=1 // pred_region
      %s14 = ssub.s32 192, 192
      %15 = vsyncadd [#allocation3], %s14
      %s17 = sshll.u32 [#allocation2], 4
      %s18 = int_to_ptr.vmem [resolvable:$true] %s17
      %20 = dma.hbm_to_vmem [thread:$0]  %s0, 192, %s18, [#allocation3]
    $region5: #{tpu_custom_call.1} parent=1 // pred_fallthru
      _
    // Predicated region
    $region6: #{tpu_custom_call.1} parent=1 // pred_check
      _
    $region7: #{tpu_custom_call.1} parent=1 // pred_check_branch
      %22 = sbr.rel (0) target = $region9
    $region8: #{tpu_custom_call.1} parent=1 // pred_region
      %s24 = ssub.s32 12288, 12288
      %25 = vsyncadd [#allocation6], %s24
      %s26 = sshll.u32 [#allocation5], 4
      %s27 = int_to_ptr.vmem [resolvable:$true] %s26
      %32 = dma.hbm_to_vmem [thread:$0]  %s1, 12288, %s27, [#allocation6], 128, 128, 8
    $region9: #{tpu_custom_call.1} parent=1 // pred_fallthru
      _
    // Predicated region
    $region10: #{tpu_custom_call.1} parent=1 // pred_check
      _
    $region11: #{tpu_custom_call.1} parent=1 // pred_check_branch
      %34 = sbr.rel (0) target = $region13
    $region12: #{tpu_custom_call.1} parent=1 // pred_region
      _
    $region13: #{tpu_custom_call.1} parent=1 // pred_fallthru
      _
    // Predicated region
    $region14: #{tpu_custom_call.1} parent=1 // pred_check
      _
    $region15: #{tpu_custom_call.1} parent=1 // pred_check_branch
      %36 = sbr.rel (0) target = $region17
    $region16: #{tpu_custom_call.1} parent=1 // pred_region
      %37 = dma.done [#allocation3], 192
    $region17: #{tpu_custom_call.1} parent=1 // pred_fallthru
      _
    // Predicated region
    $region18: #{tpu_custom_call.1} parent=1 // pred_check
      _
    $region19: #{tpu_custom_call.1} parent=1 // pred_check_branch
      %39 = sbr.rel (0) target = $region21
    $region20: #{tpu_custom_call.1} parent=1 // pred_region
      %40 = dma.done [#allocation6], 12288
    $region21: #{tpu_custom_call.1} parent=1 // pred_fallthru
      _
    %v41 = vld [vmem:[#allocation2] sm:$0xff]
    %v42 = vld [vmem:[#allocation2 + $0x8] sm:$0xf]
    %v43 = vld [vmem:[#allocation5] sm:$0xff]
    %v44 = vld [vmem:[#allocation5 + $0x8] sm:$0xff]
    %v45 = vld [vmem:[#allocation5 + $0x10] sm:$0xff]
    %v46 = vld [vmem:[#allocation5 + $0x18] sm:$0xff]
    %v47 = vld [vmem:[#allocation5 + $0x20] sm:$0xff]
    %v48 = vld [vmem:[#allocation5 + $0x28] sm:$0xff]
    %v49 = vld [vmem:[#allocation5 + $0x30] sm:$0xff]
    %v50 = vld [vmem:[#allocation5 + $0x38] sm:$0xff]
    %v51 = vld [vmem:[#allocation5 + $0x40] sm:$0xff]
    %v52 = vld [vmem:[#allocation5 + $0x48] sm:$0xff]
    %v53 = vld [vmem:[#allocation5 + $0x50] sm:$0xff]
    %v54 = vld [vmem:[#allocation5 + $0x58] sm:$0xff]
    %v55 = vld [vmem:[#allocation5 + $0x60] sm:$0xff]
    %v56 = vld [vmem:[#allocation5 + $0x68] sm:$0xff]
    %v57 = vld [vmem:[#allocation5 + $0x70] sm:$0xff]
    %v58 = vld [vmem:[#allocation5 + $0x78] sm:$0xff]
    %v59 = vld [vmem:[#allocation5 + $0x80] sm:$0xff]
    %v60 = vld [vmem:[#allocation5 + $0x88] sm:$0xff]
    %v61 = vld [vmem:[#allocation5 + $0x90] sm:$0xff]
    %v62 = vld [vmem:[#allocation5 + $0x98] sm:$0xff]
    %v63 = vld [vmem:[#allocation5 + $0xa0] sm:$0xff]
    %v64 = vld [vmem:[#allocation5 + $0xa8] sm:$0xff]
    %v65 = vld [vmem:[#allocation5 + $0xb0] sm:$0xff]
    %v66 = vld [vmem:[#allocation5 + $0xb8] sm:$0xff]
    %v67 = vld [vmem:[#allocation5 + $0xc0] sm:$0xff]
    %v68 = vld [vmem:[#allocation5 + $0xc8] sm:$0xff]
    %v69 = vld [vmem:[#allocation5 + $0xd0] sm:$0xff]
    %v70 = vld [vmem:[#allocation5 + $0xd8] sm:$0xff]
    %v71 = vld [vmem:[#allocation5 + $0xe0] sm:$0xff]
    %v72 = vld [vmem:[#allocation5 + $0xe8] sm:$0xff]
    %v73 = vld [vmem:[#allocation5 + $0xf0] sm:$0xff]
    %v74 = vld [vmem:[#allocation5 + $0xf8] sm:$0xff]
    %v75 = vld [vmem:[#allocation5 + $0x100] sm:$0xff]
    %v76 = vld [vmem:[#allocation5 + $0x108] sm:$0xff]
    %v77 = vld [vmem:[#allocation5 + $0x110] sm:$0xff]
    %v78 = vld [vmem:[#allocation5 + $0x118] sm:$0xff]
    %v79 = vld [vmem:[#allocation5 + $0x120] sm:$0xff]
    %v80 = vld [vmem:[#allocation5 + $0x128] sm:$0xff]
    %v81 = vld [vmem:[#allocation5 + $0x130] sm:$0xff]
    %v82 = vld [vmem:[#allocation5 + $0x138] sm:$0xff]
    %v83 = vld [vmem:[#allocation5 + $0x140] sm:$0xff]
    %v84 = vld [vmem:[#allocation5 + $0x148] sm:$0xff]
    %v85 = vld [vmem:[#allocation5 + $0x150] sm:$0xff]
    %v86 = vld [vmem:[#allocation5 + $0x158] sm:$0xff]
    %v87 = vld [vmem:[#allocation5 + $0x160] sm:$0xff]
    %v88 = vld [vmem:[#allocation5 + $0x168] sm:$0xff]
    %v89 = vld [vmem:[#allocation5 + $0x170] sm:$0xff]
    %v90 = vld [vmem:[#allocation5 + $0x178] sm:$0xff]
    %v91 = vld [vmem:[#allocation5 + $0x180] sm:$0xff]
    %v92 = vld [vmem:[#allocation5 + $0x188] sm:$0xff]
    %v93 = vld [vmem:[#allocation5 + $0x190] sm:$0xff]
    %v94 = vld [vmem:[#allocation5 + $0x198] sm:$0xff]
    %v95 = vld [vmem:[#allocation5 + $0x1a0] sm:$0xff]
    %v96 = vld [vmem:[#allocation5 + $0x1a8] sm:$0xff]
    %v97 = vld [vmem:[#allocation5 + $0x1b0] sm:$0xff]
    %v98 = vld [vmem:[#allocation5 + $0x1b8] sm:$0xff]
    %v99 = vld [vmem:[#allocation5 + $0x1c0] sm:$0xff]
    %v100 = vld [vmem:[#allocation5 + $0x1c8] sm:$0xff]
    %v101 = vld [vmem:[#allocation5 + $0x1d0] sm:$0xff]
    %v102 = vld [vmem:[#allocation5 + $0x1d8] sm:$0xff]
    %v103 = vld [vmem:[#allocation5 + $0x1e0] sm:$0xff]
    %v104 = vld [vmem:[#allocation5 + $0x1e8] sm:$0xff]
    %v105 = vld [vmem:[#allocation5 + $0x1f0] sm:$0xff]
    %v106 = vld [vmem:[#allocation5 + $0x1f8] sm:$0xff]
    %v107 = vld [vmem:[#allocation5 + $0x200] sm:$0xff]
    %v108 = vld [vmem:[#allocation5 + $0x208] sm:$0xff]
    %v109 = vld [vmem:[#allocation5 + $0x210] sm:$0xff]
    %v110 = vld [vmem:[#allocation5 + $0x218] sm:$0xff]
    %v111 = vld [vmem:[#allocation5 + $0x220] sm:$0xff]
    %v112 = vld [vmem:[#allocation5 + $0x228] sm:$0xff]
    %v113 = vld [vmem:[#allocation5 + $0x230] sm:$0xff]
    %v114 = vld [vmem:[#allocation5 + $0x238] sm:$0xff]
    %v115 = vld [vmem:[#allocation5 + $0x240] sm:$0xff]
    %v116 = vld [vmem:[#allocation5 + $0x248] sm:$0xff]
    %v117 = vld [vmem:[#allocation5 + $0x250] sm:$0xff]
    %v118 = vld [vmem:[#allocation5 + $0x258] sm:$0xff]
    %v119 = vld [vmem:[#allocation5 + $0x260] sm:$0xff]
    %v120 = vld [vmem:[#allocation5 + $0x268] sm:$0xff]
    %v121 = vld [vmem:[#allocation5 + $0x270] sm:$0xff]
    %v122 = vld [vmem:[#allocation5 + $0x278] sm:$0xff]
    %v123 = vld [vmem:[#allocation5 + $0x280] sm:$0xff]
    %v124 = vld [vmem:[#allocation5 + $0x288] sm:$0xff]
    %v125 = vld [vmem:[#allocation5 + $0x290] sm:$0xff]
    %v126 = vld [vmem:[#allocation5 + $0x298] sm:$0xff]
    %v127 = vld [vmem:[#allocation5 + $0x2a0] sm:$0xff]
    %v128 = vld [vmem:[#allocation5 + $0x2a8] sm:$0xff]
    %v129 = vld [vmem:[#allocation5 + $0x2b0] sm:$0xff]
    %v130 = vld [vmem:[#allocation5 + $0x2b8] sm:$0xff]
    %v131 = vld [vmem:[#allocation5 + $0x2c0] sm:$0xff]
    %v132 = vld [vmem:[#allocation5 + $0x2c8] sm:$0xff]
    %v133 = vld [vmem:[#allocation5 + $0x2d0] sm:$0xff]
    %v134 = vld [vmem:[#allocation5 + $0x2d8] sm:$0xff]
    %v135 = vld [vmem:[#allocation5 + $0x2e0] sm:$0xff]
    %v136 = vld [vmem:[#allocation5 + $0x2e8] sm:$0xff]
    %v137 = vld [vmem:[#allocation5 + $0x2f0] sm:$0xff]
    %v138 = vld [vmem:[#allocation5 + $0x2f8] sm:$0xff]
    %v139 = vld [vmem:[%s2] sm:$0x1]
    %v141 = vlaneseq
    %v142 = vshrl.u32 %v141, 7
    %v143 = vsub.s32 0, %v142
    %v144 = vrot.slane %v139, %v143
    %v148 = vcombine.high %v41, %v41
    %v150 = vunpack.c.l.s4 1983009808
    %v151 = vunpack.c.0.s8 %v150
    %v152 = vlaneseq
    %v153 = vshrl.u32 %v152, 7
    %v154 = vsub.s32 %v151, %v153
    %v155 = vrot.slane %v41, %v154
    %v157 = vunpack.c.l.s4 1983009808
    %v158 = vunpack.c.0.s8 %v157
    %v159 = vlaneseq
    %v160 = vshrl.u32 %v159, 7
    %v161 = vsub.s32 %v158, %v160
    %v162 = vrot.slane %v148, %v161
    %v163 = vcombine.high %v155, %v155
    %v164 = vcombine.high %v162, %v162
    %v166 = vunpack.c.l.s4 1983009808
    %v167 = vunpack.c.0.s8 %v166
    %v168 = vlaneseq
    %v169 = vshrl.u32 %v168, 7
    %v170 = vsub.s32 %v167, %v169
    %v171 = vrot.slane %v42, %v170
    %v172 = vcombine.high %v171, %v171
    %179 = vmatprep.subr.mxu0 0.0
    %180 = vmatpush1.msra.mxu0 %v43
    %181 = vmatprep.subr.mxu0 0.0
    %182 = vmatpush1.msra.mxu0 %v44
    %183 = vmatprep.subr.mxu0 0.0
    %184 = vmatpush1.msra.mxu0 %v45
    %185 = vmatprep.subr.mxu0 0.0
    %186 = vmatpush1.msra.mxu0 %v46
    %187 = vmatprep.subr.mxu0 0.0
    %188 = vmatpush1.msra.mxu0 %v47
    %189 = vmatprep.subr.mxu0 0.0
    %190 = vmatpush1.msra.mxu0 %v48
    %191 = vmatprep.subr.mxu0 0.0
    %192 = vmatpush1.msra.mxu0 %v49
    %193 = vmatprep.subr.mxu0 0.0
    %194 = vmatpush1.msra.mxu0 %v50
    %195 = vmatprep.subr.mxu0 0.0
    %196 = vmatpush1.msra.mxu0 %v51
    %197 = vmatprep.subr.mxu0 0.0
    %198 = vmatpush1.msra.mxu0 %v52
    %199 = vmatprep.subr.mxu0 0.0
    %200 = vmatpush1.msra.mxu0 %v53
    %201 = vmatprep.subr.mxu0 0.0
    %202 = vmatpush1.msra.mxu0 %v54
    %203 = vmatprep.subr.mxu0 0.0
    %204 = vmatpush1.msra.mxu0 %v55
    %205 = vmatprep.subr.mxu0 0.0
    %206 = vmatpush1.msra.mxu0 %v56
    %207 = vmatprep.subr.mxu0 0.0
    %208 = vmatpush1.msra.mxu0 %v57
    %209 = vmatprep.subr.mxu0 0.0
    %210 = vmatpush1.msra.mxu0 %v58
    %211 = vmatprep.subr.mxu0 0.0
    %212 = vmatpush1.msra.mxu0 %v59
    %213 = vmatprep.subr.mxu0 0.0
    %214 = vmatpush1.msra.mxu0 %v60
    %215 = vmatprep.subr.mxu0 0.0
    %216 = vmatpush1.msra.mxu0 %v61
    %217 = vmatprep.subr.mxu0 0.0
    %218 = vmatpush1.msra.mxu0 %v62
    %219 = vmatprep.subr.mxu0 0.0
    %220 = vmatpush1.msra.mxu0 %v63
    %221 = vmatprep.subr.mxu0 0.0
    %222 = vmatpush1.msra.mxu0 %v64
    %223 = vmatprep.subr.mxu0 0.0
    %224 = vmatpush1.msra.mxu0 %v65
    %225 = vmatprep.subr.mxu0 0.0
    %226 = vmatpush1.msra.mxu0 %v66
    %227 = vmatprep.subr.mxu0 0.0
    %228 = vmatpush1.msra.mxu0 %v67
    %229 = vmatprep.subr.mxu0 0.0
    %230 = vmatpush1.msra.mxu0 %v68
    %231 = vmatprep.subr.mxu0 0.0
    %232 = vmatpush1.msra.mxu0 %v69
    %233 = vmatprep.subr.mxu0 0.0
    %234 = vmatpush1.msra.mxu0 %v70
    %235 = vmatprep.subr.mxu0 0.0
    %236 = vmatpush1.msra.mxu0 %v71
    %237 = vmatprep.subr.mxu0 0.0
    %238 = vmatpush1.msra.mxu0 %v72
    %239 = vmatprep.subr.mxu0 0.0
    %240 = vmatpush1.msra.mxu0 %v73
    %241 = vmatprep.subr.mxu0 0.0
    %242 = vmatpush1.msra.mxu0 %v74
    %243 = vmatprep.mubr.f32.mxu0 %v163
    %244 = vmatmul.mubr.f32.gmra.mrb[0].mxu0 %v155
    %v245 = vpop.f32.mrb[0].mxu0
    %v246 = vadd.f32 %v144, %v245
    %v247 = vpop.f32.mrb[0].mxu0
    %248 = vdwg.mxu0
    %249 = vmatprep.subr.mxu0 0.0
    %250 = vmatpush1.msra.mxu0 %v75
    %251 = vmatprep.subr.mxu0 0.0
    %252 = vmatpush1.msra.mxu0 %v76
    %253 = vmatprep.subr.mxu0 0.0
    %254 = vmatpush1.msra.mxu0 %v77
    %255 = vmatprep.subr.mxu0 0.0
    %256 = vmatpush1.msra.mxu0 %v78
    %257 = vmatprep.subr.mxu0 0.0
    %258 = vmatpush1.msra.mxu0 %v79
    %259 = vmatprep.subr.mxu0 0.0
    %260 = vmatpush1.msra.mxu0 %v80
    %261 = vmatprep.subr.mxu0 0.0
    %262 = vmatpush1.msra.mxu0 %v81
    %263 = vmatprep.subr.mxu0 0.0
    %264 = vmatpush1.msra.mxu0 %v82
    %265 = vmatprep.subr.mxu0 0.0
    %266 = vmatpush1.msra.mxu0 %v83
    %267 = vmatprep.subr.mxu0 0.0
    %268 = vmatpush1.msra.mxu0 %v84
    %269 = vmatprep.subr.mxu0 0.0
    %270 = vmatpush1.msra.mxu0 %v85
    %271 = vmatprep.subr.mxu0 0.0
    %272 = vmatpush1.msra.mxu0 %v86
    %273 = vmatprep.subr.mxu0 0.0
    %274 = vmatpush1.msra.mxu0 %v87
    %275 = vmatprep.subr.mxu0 0.0
    %276 = vmatpush1.msra.mxu0 %v88
    %277 = vmatprep.subr.mxu0 0.0
    %278 = vmatpush1.msra.mxu0 %v89
    %279 = vmatprep.subr.mxu0 0.0
    %280 = vmatpush1.msra.mxu0 %v90
    %281 = vmatprep.subr.mxu0 0.0
    %282 = vmatpush1.msra.mxu0 %v91
    %283 = vmatprep.subr.mxu0 0.0
    %284 = vmatpush1.msra.mxu0 %v92
    %285 = vmatprep.subr.mxu0 0.0
    %286 = vmatpush1.msra.mxu0 %v93
    %287 = vmatprep.subr.mxu0 0.0
    %288 = vmatpush1.msra.mxu0 %v94
    %289 = vmatprep.subr.mxu0 0.0
    %290 = vmatpush1.msra.mxu0 %v95
    %291 = vmatprep.subr.mxu0 0.0
    %292 = vmatpush1.msra.mxu0 %v96
    %293 = vmatprep.subr.mxu0 0.0
    %294 = vmatpush1.msra.mxu0 %v97
    %295 = vmatprep.subr.mxu0 0.0
    %296 = vmatpush1.msra.mxu0 %v98
    %297 = vmatprep.subr.mxu0 0.0
    %298 = vmatpush1.msra.mxu0 %v99
    %299 = vmatprep.subr.mxu0 0.0
    %300 = vmatpush1.msra.mxu0 %v100
    %301 = vmatprep.subr.mxu0 0.0
    %302 = vmatpush1.msra.mxu0 %v101
    %303 = vmatprep.subr.mxu0 0.0
    %304 = vmatpush1.msra.mxu0 %v102
    %305 = vmatprep.subr.mxu0 0.0
    %306 = vmatpush1.msra.mxu0 %v103
    %307 = vmatprep.subr.mxu0 0.0
    %308 = vmatpush1.msra.mxu0 %v104
    %309 = vmatprep.subr.mxu0 0.0
    %310 = vmatpush1.msra.mxu0 %v105
    %311 = vmatprep.subr.mxu0 0.0
    %312 = vmatpush1.msra.mxu0 %v106
    %313 = vmatprep.mubr.f32.mxu0 %v164
    %314 = vmatmul.mubr.f32.gmra.mrb[0].mxu0 %v162
    %v315 = vpop.f32.mrb[0].mxu0
    %v316 = vadd.f32 %v246, %v315
    %v317 = vpop.f32.mrb[0].mxu0
    %318 = vdwg.mxu0
    %319 = vmatprep.subr.mxu0 0.0
    %320 = vmatpush1.msra.mxu0 %v107
    %321 = vmatprep.subr.mxu0 0.0
    %322 = vmatpush1.msra.mxu0 %v108
    %323 = vmatprep.subr.mxu0 0.0
    %324 = vmatpush1.msra.mxu0 %v109
    %325 = vmatprep.subr.mxu0 0.0
    %326 = vmatpush1.msra.mxu0 %v110
    %327 = vmatprep.subr.mxu0 0.0
    %328 = vmatpush1.msra.mxu0 %v111
    %329 = vmatprep.subr.mxu0 0.0
    %330 = vmatpush1.msra.mxu0 %v112
    %331 = vmatprep.subr.mxu0 0.0
    %332 = vmatpush1.msra.mxu0 %v113
    %333 = vmatprep.subr.mxu0 0.0
    %334 = vmatpush1.msra.mxu0 %v114
    %335 = vmatprep.subr.mxu0 0.0
    %336 = vmatpush1.msra.mxu0 %v115
    %337 = vmatprep.subr.mxu0 0.0
    %338 = vmatpush1.msra.mxu0 %v116
    %339 = vmatprep.subr.mxu0 0.0
    %340 = vmatpush1.msra.mxu0 %v117
    %341 = vmatprep.subr.mxu0 0.0
    %342 = vmatpush1.msra.mxu0 %v118
    %343 = vmatprep.subr.mxu0 0.0
    %344 = vmatpush1.msra.mxu0 %v119
    %345 = vmatprep.subr.mxu0 0.0
    %346 = vmatpush1.msra.mxu0 %v120
    %347 = vmatprep.subr.mxu0 0.0
    %348 = vmatpush1.msra.mxu0 %v121
    %349 = vmatprep.subr.mxu0 0.0
    %350 = vmatpush1.msra.mxu0 %v122
    %351 = vmatprep.subr.mxu0 0.0
    %352 = vmatpush1.msra.mxu0 %v123
    %353 = vmatprep.subr.mxu0 0.0
    %354 = vmatpush1.msra.mxu0 %v124
    %355 = vmatprep.subr.mxu0 0.0
    %356 = vmatpush1.msra.mxu0 %v125
    %357 = vmatprep.subr.mxu0 0.0
    %358 = vmatpush1.msra.mxu0 %v126
    %359 = vmatprep.subr.mxu0 0.0
    %360 = vmatpush1.msra.mxu0 %v127
    %361 = vmatprep.subr.mxu0 0.0
    %362 = vmatpush1.msra.mxu0 %v128
    %363 = vmatprep.subr.mxu0 0.0
    %364 = vmatpush1.msra.mxu0 %v129
    %365 = vmatprep.subr.mxu0 0.0
    %366 = vmatpush1.msra.mxu0 %v130
    %367 = vmatprep.subr.mxu0 0.0
    %368 = vmatpush1.msra.mxu0 %v131
    %369 = vmatprep.subr.mxu0 0.0
    %370 = vmatpush1.msra.mxu0 %v132
    %371 = vmatprep.subr.mxu0 0.0
    %372 = vmatpush1.msra.mxu0 %v133
    %373 = vmatprep.subr.mxu0 0.0
    %374 = vmatpush1.msra.mxu0 %v134
    %375 = vmatprep.subr.mxu0 0.0
    %376 = vmatpush1.msra.mxu0 %v135
    %377 = vmatprep.subr.mxu0 0.0
    %378 = vmatpush1.msra.mxu0 %v136
    %379 = vmatprep.subr.mxu0 0.0
    %380 = vmatpush1.msra.mxu0 %v137
    %381 = vmatprep.subr.mxu0 0.0
    %382 = vmatpush1.msra.mxu0 %v138
    %383 = vmatprep.mubr.f32.mxu0 %v172
    %384 = vmatmul.mubr.f32.gmra.mrb[0].mxu0 %v171
    %v385 = vpop.f32.mrb[0].mxu0
    %v386 = vadd.f32 %v316, %v385
    %v387 = vpop.f32.mrb[0].mxu0
    %388 = vdwg.mxu0
    %389 = vst [vmem:[#allocation7] sm:$0x3] %v386
    // Predicated region
    $region22: #{tpu_custom_call.1} parent=1 // pred_check
      _
    $region23: #{tpu_custom_call.1} parent=1 // pred_check_branch
      %391 = sbr.rel (0) target = $region25
    $region24: #{tpu_custom_call.1} parent=1 // pred_region
      %s393 = ssub.s32 32, 32
      %394 = vsyncadd [#allocation4], %s393
      %s396 = sshll.u32 [#allocation7], 4
      %s397 = int_to_ptr.vmem [resolvable:$true] %s396
      %399 = dma.vmem_to_hbm [thread:$0]  %s397, 32, %s3, [#allocation4]
    $region25: #{tpu_custom_call.1} parent=1 // pred_fallthru
      _
    // Predicated region
    $region26: #{tpu_custom_call.1} parent=1 // pred_check
      _
    $region27: #{tpu_custom_call.1} parent=1 // pred_check_branch
      %401 = sbr.rel (0) target = $region29
    $region28: #{tpu_custom_call.1} parent=1 // pred_region
      %402 = dma.done [#allocation4], 32
    $region29: #{tpu_custom_call.1} parent=1 // pred_fallthru
      _
    %403 = vsyncpa [#allocation3], 1
    %404 = vsyncpa [#allocation6], 1
    %405 = vsyncpa [#allocation4], 1

</llo_original>
